<compile_context>
chip_gen: v7x
topology: tpu7x:2x2x1
jax: 0.10.0
libtpu: 0.0.40
codegen_flags: <defaults>
</compile_context>

<pallas_src>
from functools import partial

import jax
import jax.numpy as jnp
from jax.experimental import pallas as pl
from jax.experimental.pallas import tpu as pltpu

N_PAD = 128   # padded node count (do not shrink -- see notes above)
F_PAD = 128   # padded feature / hidden / class width


def _gcn_kernel(a_ref, x_ref, w_ref, b_ref, out_ref, h_ref):
    # a_ref: [128,128] bf16   normalized adjacency A_hat
    # x_ref: [128,128] bf16   node features
    # w_ref: [4,128,128] bf16 packed (W1, W2, W3, Wc)
    # b_ref: [8,128]   f32    packed biases (rows 0..3 used)
    a = a_ref[...]
    h = x_ref[...]                     # bf16 activations fed to the MXU
    h_f32 = None
    # 3 x GCNConv: tanh(A_hat @ (H @ Wl) + bl); bf16 operands, f32 accumulation.
    for layer in range(3):
        z = jnp.dot(h, w_ref[layer], preferred_element_type=jnp.float32)
        z = jnp.dot(a, z.astype(jnp.bfloat16), preferred_element_type=jnp.float32)
        h_f32 = jnp.tanh(z + b_ref[layer:layer + 1, :])   # bias + tanh in f32
        h = h_f32.astype(jnp.bfloat16)
    # Node embedding output (rows >= N are padding garbage; sliced off on host).
    h_ref[...] = h_f32
    # Classifier: h @ Wc + bc
    out_ref[...] = (jnp.dot(h, w_ref[3], preferred_element_type=jnp.float32)
                    + b_ref[3:4, :])


def pack_params(params):
    """Pad + pack all weights/biases ONCE (outside the per-call jit path)."""
    w1, b1, w2, b2, w3, b3, wc, bc = params

    def pad_w(w):
        r, c = w.shape
        return jnp.pad(w, ((0, F_PAD - r), (0, F_PAD - c)))

    def pad_b(b):
        return jnp.pad(b, (0, F_PAD - b.shape[0]))

    w_packed = jnp.stack([pad_w(w1), pad_w(w2), pad_w(w3), pad_w(wc)]
                         ).astype(jnp.bfloat16)                  # [4,128,128] bf16
    b_packed = jnp.zeros((8, F_PAD), jnp.float32)
    b_packed = (b_packed.at[0].set(pad_b(b1)).at[1].set(pad_b(b2))
                .at[2].set(pad_b(b3)).at[3].set(pad_b(bc)))      # [8,128] f32
    return w_packed, b_packed


@partial(jax.jit, static_argnames=("h_dim", "c_out"))
def gcn_forward(a_hat, x, w_packed, b_packed, *, h_dim, c_out):
    n = a_hat.shape[0]
    a_p = jnp.pad(a_hat, ((0, N_PAD - n), (0, N_PAD - a_hat.shape[1]))
                  ).astype(jnp.bfloat16)
    x_p = jnp.pad(x, ((0, N_PAD - x.shape[0]), (0, F_PAD - x.shape[1]))
                  ).astype(jnp.bfloat16)

    vm = pltpu.MemorySpace.VMEM
    out_p, h_p = pl.pallas_call(
        _gcn_kernel,
        out_shape=(jax.ShapeDtypeStruct((N_PAD, F_PAD), jnp.float32),
                   jax.ShapeDtypeStruct((N_PAD, F_PAD), jnp.float32)),
        in_specs=[pl.BlockSpec(memory_space=vm) for _ in range(4)],
        out_specs=(pl.BlockSpec(memory_space=vm),
                   pl.BlockSpec(memory_space=vm)),
    )(a_p, x_p, w_packed, b_packed)
    return out_p[:n, :c_out], h_p[:n, :h_dim]


def build_norm_adj(key, n):
    # Deterministic synthetic undirected graph (stand-in for the Karate Club
    # edge_index), then GCN normalization with self-loops.
    u = jax.random.uniform(key, (n, n))
    upper = jnp.triu((u < 0.15).astype(jnp.float32), k=1)
    a = upper + upper.T
    a_tilde = a + jnp.eye(n, dtype=jnp.float32)          # A + I
    deg = a_tilde.sum(axis=1)
    dinv = 1.0 / jnp.sqrt(deg)
    return a_tilde * dinv[:, None] * dinv[None, :]       # D^-1/2 (A+I) D^-1/2


def glorot(key, shape):
    fan_in, fan_out = shape
    lim = jnp.sqrt(6.0 / (fan_in + fan_out))
    return jax.random.uniform(key, shape, jnp.float32, -lim, lim)


if __name__ == "__main__":
    # KarateClub: 34 nodes, 34 one-hot node features, 4 classes.
    N, F, C = 34, 34, 4
    key = jax.random.PRNGKey(0)
    k_adj, k1, k2, k3, k4 = jax.random.split(key, 5)

    a_hat = build_norm_adj(k_adj, N)
    x = jnp.eye(N, F, dtype=jnp.float32)   # KarateClub node features are one-hot

    params = (
        glorot(k1, (F, 4)), jnp.zeros((4,), jnp.float32),   # conv1
        glorot(k2, (4, 4)), jnp.zeros((4,), jnp.float32),   # conv2
        glorot(k3, (4, 2)), jnp.zeros((2,), jnp.float32),   # conv3
        glorot(k4, (2, C)), jnp.zeros((C,), jnp.float32),   # classifier Linear(2, C)
    )
    w_packed, b_packed = pack_params(params)   # padded/packed once at init

    out, h = gcn_forward(a_hat, x, w_packed, b_packed, h_dim=2, c_out=C)
    jax.block_until_ready((out, h))
    assert out.shape == (N, C) and h.shape == (N, 2)
    assert bool(jnp.all(jnp.isfinite(out))) and bool(jnp.all(jnp.isfinite(h)))
    print("KERNEL_OK")
</pallas_src>

<mosaic_0001>
module attributes {stable_mosaic.version = 11 : i64} {
  func.func @_gcn_kernel(%arg0: memref<128x128xbf16, #tpu.memory_space<vmem>>, %arg1: memref<128x128xbf16, #tpu.memory_space<vmem>>, %arg2: memref<4x128x128xbf16, #tpu.memory_space<vmem>>, %arg3: memref<8x128xf32, #tpu.memory_space<vmem>>, %arg4: memref<128x128xf32, #tpu.memory_space<vmem>>, %arg5: memref<128x128xf32, #tpu.memory_space<vmem>>) attributes {dimension_semantics = [], scalar_prefetch = 0 : i64, scratch_operands = 0 : i64, tpu.core_type = #tpu.core_type<tc>} {
    %c0 = arith.constant 0 : index
    %c0_0 = arith.constant 0 : index
    %0 = vector.load %arg0[%c0, %c0_0] : memref<128x128xbf16, #tpu.memory_space<vmem>>, vector<128x128xbf16>
    %c0_1 = arith.constant 0 : index
    %c0_2 = arith.constant 0 : index
    %1 = vector.load %arg1[%c0_1, %c0_2] : memref<128x128xbf16, #tpu.memory_space<vmem>>, vector<128x128xbf16>
    %c0_3 = arith.constant 0 : index
    %c0_4 = arith.constant 0 : index
    %c0_5 = arith.constant 0 : index
    %2 = vector.load %arg2[%c0_3, %c0_4, %c0_5] : memref<4x128x128xbf16, #tpu.memory_space<vmem>>, vector<1x128x128xbf16>
    %3 = vector.shape_cast %2 : vector<1x128x128xbf16> to vector<128x128xbf16>
    %cst = arith.constant dense<0.000000e+00> : vector<128x128xf32>
    %4 = tpu.matmul %1, %3, %cst {dimension_numbers = #tpu.dot_dimension_numbers<[1], [0], [0], [1], [0, 0, 1, 1], [], []>} : vector<128x128xbf16>, vector<128x128xbf16>, vector<128x128xf32> -> vector<128x128xf32>
    %5 = arith.truncf %4 : vector<128x128xf32> to vector<128x128xbf16>
    %cst_6 = arith.constant dense<0.000000e+00> : vector<128x128xf32>
    %6 = tpu.matmul %0, %5, %cst_6 {dimension_numbers = #tpu.dot_dimension_numbers<[1], [0], [0], [1], [0, 0, 1, 1], [], []>} : vector<128x128xbf16>, vector<128x128xbf16>, vector<128x128xf32> -> vector<128x128xf32>
    %c0_7 = arith.constant 0 : index
    %c0_8 = arith.constant 0 : index
    %7 = vector.load %arg3[%c0_7, %c0_8] : memref<8x128xf32, #tpu.memory_space<vmem>>, vector<1x128xf32>
    %8 = vector.broadcast %7 : vector<1x128xf32> to vector<128x128xf32>
    %9 = arith.addf %6, %8 : vector<128x128xf32>
    %10 = math.tanh %9 : vector<128x128xf32>
    %11 = arith.truncf %10 : vector<128x128xf32> to vector<128x128xbf16>
    %c1 = arith.constant 1 : index
    %c0_9 = arith.constant 0 : index
    %c0_10 = arith.constant 0 : index
    %12 = vector.load %arg2[%c1, %c0_9, %c0_10] : memref<4x128x128xbf16, #tpu.memory_space<vmem>>, vector<1x128x128xbf16>
    %13 = vector.shape_cast %12 : vector<1x128x128xbf16> to vector<128x128xbf16>
    %cst_11 = arith.constant dense<0.000000e+00> : vector<128x128xf32>
    %14 = tpu.matmul %11, %13, %cst_11 {dimension_numbers = #tpu.dot_dimension_numbers<[1], [0], [0], [1], [0, 0, 1, 1], [], []>} : vector<128x128xbf16>, vector<128x128xbf16>, vector<128x128xf32> -> vector<128x128xf32>
    %15 = arith.truncf %14 : vector<128x128xf32> to vector<128x128xbf16>
    %cst_12 = arith.constant dense<0.000000e+00> : vector<128x128xf32>
    %16 = tpu.matmul %0, %15, %cst_12 {dimension_numbers = #tpu.dot_dimension_numbers<[1], [0], [0], [1], [0, 0, 1, 1], [], []>} : vector<128x128xbf16>, vector<128x128xbf16>, vector<128x128xf32> -> vector<128x128xf32>
    %c1_13 = arith.constant 1 : index
    %c0_14 = arith.constant 0 : index
    %17 = vector.load %arg3[%c1_13, %c0_14] : memref<8x128xf32, #tpu.memory_space<vmem>>, vector<1x128xf32>
    %18 = vector.broadcast %17 : vector<1x128xf32> to vector<128x128xf32>
    %19 = arith.addf %16, %18 : vector<128x128xf32>
    %20 = math.tanh %19 : vector<128x128xf32>
    %21 = arith.truncf %20 : vector<128x128xf32> to vector<128x128xbf16>
    %c2 = arith.constant 2 : index
    %c0_15 = arith.constant 0 : index
    %c0_16 = arith.constant 0 : index
    %22 = vector.load %arg2[%c2, %c0_15, %c0_16] : memref<4x128x128xbf16, #tpu.memory_space<vmem>>, vector<1x128x128xbf16>
    %23 = vector.shape_cast %22 : vector<1x128x128xbf16> to vector<128x128xbf16>
    %cst_17 = arith.constant dense<0.000000e+00> : vector<128x128xf32>
    %24 = tpu.matmul %21, %23, %cst_17 {dimension_numbers = #tpu.dot_dimension_numbers<[1], [0], [0], [1], [0, 0, 1, 1], [], []>} : vector<128x128xbf16>, vector<128x128xbf16>, vector<128x128xf32> -> vector<128x128xf32>
    %25 = arith.truncf %24 : vector<128x128xf32> to vector<128x128xbf16>
    %cst_18 = arith.constant dense<0.000000e+00> : vector<128x128xf32>
    %26 = tpu.matmul %0, %25, %cst_18 {dimension_numbers = #tpu.dot_dimension_numbers<[1], [0], [0], [1], [0, 0, 1, 1], [], []>} : vector<128x128xbf16>, vector<128x128xbf16>, vector<128x128xf32> -> vector<128x128xf32>
    %c2_19 = arith.constant 2 : index
    %c0_20 = arith.constant 0 : index
    %27 = vector.load %arg3[%c2_19, %c0_20] : memref<8x128xf32, #tpu.memory_space<vmem>>, vector<1x128xf32>
    %28 = vector.broadcast %27 : vector<1x128xf32> to vector<128x128xf32>
    %29 = arith.addf %26, %28 : vector<128x128xf32>
    %30 = math.tanh %29 : vector<128x128xf32>
    %31 = arith.truncf %30 : vector<128x128xf32> to vector<128x128xbf16>
    %c0_21 = arith.constant 0 : index
    %c0_22 = arith.constant 0 : index
    %32 = vector.load %arg5[%c0_21, %c0_22] : memref<128x128xf32, #tpu.memory_space<vmem>>, vector<128x128xf32>
    tpu.vector_store %arg5[%c0_21, %c0_22], %30 {strides = array<i32>} : memref<128x128xf32, #tpu.memory_space<vmem>>, vector<128x128xf32>,
    %c3 = arith.constant 3 : index
    %c0_23 = arith.constant 0 : index
    %c0_24 = arith.constant 0 : index
    %33 = vector.load %arg2[%c3, %c0_23, %c0_24] : memref<4x128x128xbf16, #tpu.memory_space<vmem>>, vector<1x128x128xbf16>
    %34 = vector.shape_cast %33 : vector<1x128x128xbf16> to vector<128x128xbf16>
    %cst_25 = arith.constant dense<0.000000e+00> : vector<128x128xf32>
    %35 = tpu.matmul %31, %34, %cst_25 {dimension_numbers = #tpu.dot_dimension_numbers<[1], [0], [0], [1], [0, 0, 1, 1], [], []>} : vector<128x128xbf16>, vector<128x128xbf16>, vector<128x128xf32> -> vector<128x128xf32>
    %c3_26 = arith.constant 3 : index
    %c0_27 = arith.constant 0 : index
    %36 = vector.load %arg3[%c3_26, %c0_27] : memref<8x128xf32, #tpu.memory_space<vmem>>, vector<1x128xf32>
    %37 = vector.broadcast %36 : vector<1x128xf32> to vector<128x128xf32>
    %38 = arith.addf %35, %37 : vector<128x128xf32>
    %c0_28 = arith.constant 0 : index
    %c0_29 = arith.constant 0 : index
    %39 = vector.load %arg4[%c0_28, %c0_29] : memref<128x128xf32, #tpu.memory_space<vmem>>, vector<128x128xf32>
    tpu.vector_store %arg4[%c0_28, %c0_29], %38 {strides = array<i32>} : memref<128x128xf32, #tpu.memory_space<vmem>>, vector<128x128xf32>,
    return
  }
}

</mosaic_0001>

<llo_original>
// kernel: gcn_forward.1
$region0: #{gcn_forward.1}
  #allocation0 [shape = 'u32[]', space=smem, size = 0x4, offset = 0x4, fixed_abs, tag = 'smem constant byte address 0x4 - core index']
  #allocation1 [shape = 'u32[144,128]{1,0:T(1,128)}', space=vmem, size = 0x12000, scoped, tag = 'internal scratch']
  %s0 = inlined_call_operand.vmem [shape: bf16[128,128], index: 0, kind: input, shape index: {}]
  %s1 = inlined_call_operand.vmem [shape: bf16[128,128], index: 1, kind: input, shape index: {}]
  %s2 = inlined_call_operand.vmem [shape: bf16[4,128,128], index: 2, kind: input, shape index: {}]
  %s3 = inlined_call_operand.vmem [shape: f32[8,128], index: 3, kind: input, shape index: {}]
  %s4 = inlined_call_operand.vmem [shape: f32[128,128], index: 4, kind: output, shape index: {0}]
  %s5 = inlined_call_operand.vmem [shape: f32[128,128], index: 5, kind: output, shape index: {1}]
  %6 = xla_tuple %s4, %s5
  %s7 = sld [smem:[#allocation0]]
  $region34: #{gcn_forward.1} parent=0
    _
  %s9 = ssub.s32 1, %s7
  %s10 = scalar_select 0, %s9, %s7
  // Predicated region
  $region2: #{gcn_forward.1} parent=0 // pred_check
    _
  $region3: #{gcn_forward.1} parent=0 // pred_check_branch
    %12 = sbr.rel (0) target = $region5
  $region4: #{gcn_forward.1} parent=0 // pred_region
    _
  $region5: #{gcn_forward.1} parent=0 // pred_fallthru
    _
  // Predicated region
  $region6: #{gcn_forward.1} parent=0 // pred_check
    _
  $region7: #{gcn_forward.1} parent=0 // pred_check_branch
    %14 = sbr.rel (0) target = $region9
  $region8: #{gcn_forward.1} parent=0 // pred_region
    _
  $region9: #{gcn_forward.1} parent=0 // pred_fallthru
    _
  // Predicated region
  $region10: #{gcn_forward.1} parent=0 // pred_check
    _
  $region11: #{gcn_forward.1} parent=0 // pred_check_branch
    %16 = sbr.rel (0) target = $region13
  $region12: #{gcn_forward.1} parent=0 // pred_region
    _
  $region13: #{gcn_forward.1} parent=0 // pred_fallthru
    _
  // Predicated region
  $region14: #{gcn_forward.1} parent=0 // pred_check
    _
  $region15: #{gcn_forward.1} parent=0 // pred_check_branch
    %18 = sbr.rel (0) target = $region17
  $region16: #{gcn_forward.1} parent=0 // pred_region
    _
  $region17: #{gcn_forward.1} parent=0 // pred_fallthru
    _
  %v20 = vld [vmem:[%s0] sm:$0xf]
  %v21 = vld [vmem:[%s0 + $0x4] sm:$0xf]
  %v22 = vld [vmem:[%s0 + $0x8] sm:$0xf]
  %v23 = vld [vmem:[%s0 + $0xc] sm:$0xf]
  %v24 = vld [vmem:[%s0 + $0x10] sm:$0xf]
  %v25 = vld [vmem:[%s0 + $0x14] sm:$0xf]
  %v26 = vld [vmem:[%s0 + $0x18] sm:$0xf]
  %v27 = vld [vmem:[%s0 + $0x1c] sm:$0xf]
  %v28 = vld [vmem:[%s0 + $0x20] sm:$0xf]
  %v29 = vld [vmem:[%s0 + $0x24] sm:$0xf]
  %v30 = vld [vmem:[%s0 + $0x28] sm:$0xf]
  %v31 = vld [vmem:[%s0 + $0x2c] sm:$0xf]
  %v32 = vld [vmem:[%s0 + $0x30] sm:$0xf]
  %v33 = vld [vmem:[%s0 + $0x34] sm:$0xf]
  %v34 = vld [vmem:[%s0 + $0x38] sm:$0xf]
  %v35 = vld [vmem:[%s0 + $0x3c] sm:$0xf]
  %v36 = vld [vmem:[%s1] sm:$0xf]
  %v37 = vld [vmem:[%s1 + $0x4] sm:$0xf]
  %v38 = vld [vmem:[%s1 + $0x8] sm:$0xf]
  %v39 = vld [vmem:[%s1 + $0xc] sm:$0xf]
  %v40 = vld [vmem:[%s1 + $0x10] sm:$0xf]
  %v41 = vld [vmem:[%s1 + $0x14] sm:$0xf]
  %v42 = vld [vmem:[%s1 + $0x18] sm:$0xf]
  %v43 = vld [vmem:[%s1 + $0x1c] sm:$0xf]
  %v44 = vld [vmem:[%s1 + $0x20] sm:$0xf]
  %v45 = vld [vmem:[%s1 + $0x24] sm:$0xf]
  %v46 = vld [vmem:[%s1 + $0x28] sm:$0xf]
  %v47 = vld [vmem:[%s1 + $0x2c] sm:$0xf]
  %v48 = vld [vmem:[%s1 + $0x30] sm:$0xf]
  %v49 = vld [vmem:[%s1 + $0x34] sm:$0xf]
  %v50 = vld [vmem:[%s1 + $0x38] sm:$0xf]
  %v51 = vld [vmem:[%s1 + $0x3c] sm:$0xf]
  %v52 = vld [vmem:[%s2] sm:$0xf]
  %v53 = vld [vmem:[%s2 + $0x4] sm:$0xf]
  %v54 = vld [vmem:[%s2 + $0x8] sm:$0xf]
  %v55 = vld [vmem:[%s2 + $0xc] sm:$0xf]
  %v56 = vld [vmem:[%s2 + $0x10] sm:$0xf]
  %v57 = vld [vmem:[%s2 + $0x14] sm:$0xf]
  %v58 = vld [vmem:[%s2 + $0x18] sm:$0xf]
  %v59 = vld [vmem:[%s2 + $0x1c] sm:$0xf]
  %v60 = vld [vmem:[%s2 + $0x20] sm:$0xf]
  %v61 = vld [vmem:[%s2 + $0x24] sm:$0xf]
  %v62 = vld [vmem:[%s2 + $0x28] sm:$0xf]
  %v63 = vld [vmem:[%s2 + $0x2c] sm:$0xf]
  %v64 = vld [vmem:[%s2 + $0x30] sm:$0xf]
  %v65 = vld [vmem:[%s2 + $0x34] sm:$0xf]
  %v66 = vld [vmem:[%s2 + $0x38] sm:$0xf]
  %v67 = vld [vmem:[%s2 + $0x3c] sm:$0xf]
  %v84 = vunpack.c.l.b16 %v36
  %v85 = vunpack.c.l.b16 %v37
  %v86 = vunpack.c.l.b16 %v38
  %v87 = vunpack.c.l.b16 %v39
  %v88 = vunpack.c.l.b16 %v40
  %v89 = vunpack.c.l.b16 %v41
  %v90 = vunpack.c.l.b16 %v42
  %v91 = vunpack.c.l.b16 %v43
  %v92 = vunpack.c.l.b16 %v44
  %v93 = vunpack.c.l.b16 %v45
  %v94 = vunpack.c.l.b16 %v46
  %v95 = vunpack.c.l.b16 %v47
  %v96 = vunpack.c.l.b16 %v48
  %v97 = vunpack.c.l.b16 %v49
  %v98 = vunpack.c.l.b16 %v50
  %v99 = vunpack.c.l.b16 %v51
  %v100 = vpack.c.b16 %v85, %v84
  %v101 = vpack.c.b16 %v87, %v86
  %v102 = vpack.c.b16 %v89, %v88
  %v103 = vpack.c.b16 %v91, %v90
  %v104 = vpack.c.b16 %v93, %v92
  %v105 = vpack.c.b16 %v95, %v94
  %v106 = vpack.c.b16 %v97, %v96
  %v107 = vpack.c.b16 %v99, %v98
  %v132 = vunpack.c.l.b16 %v52
  %v133 = vunpack.c.l.b16 %v53
  %v134 = vunpack.c.l.b16 %v54
  %v135 = vunpack.c.l.b16 %v55
  %v136 = vunpack.c.l.b16 %v56
  %v137 = vunpack.c.l.b16 %v57
  %v138 = vunpack.c.l.b16 %v58
  %v139 = vunpack.c.l.b16 %v59
  %v140 = vunpack.c.l.b16 %v60
  %v141 = vunpack.c.l.b16 %v61
  %v142 = vunpack.c.l.b16 %v62
  %v143 = vunpack.c.l.b16 %v63
  %v144 = vunpack.c.l.b16 %v64
  %v145 = vunpack.c.l.b16 %v65
  %v146 = vunpack.c.l.b16 %v66
  %v147 = vunpack.c.l.b16 %v67
  %v148 = vpack.c.b16 %v133, %v132
  %v149 = vpack.c.b16 %v135, %v134
  %v150 = vpack.c.b16 %v137, %v136
  %v151 = vpack.c.b16 %v139, %v138
  %v152 = vpack.c.b16 %v141, %v140
  %v153 = vpack.c.b16 %v143, %v142
  %v154 = vpack.c.b16 %v145, %v144
  %v155 = vpack.c.b16 %v147, %v146
  %164 = vmatprep.subr.bf16.mxu0 0
  %165 = vmatpush1.bf16.msra.mxu0 %v148
  %166 = vmatprep.subr.bf16.mxu0 0
  %167 = vmatpush1.bf16.msra.mxu0 %v149
  %168 = vmatprep.subr.bf16.mxu0 0
  %169 = vmatpush1.bf16.msra.mxu0 %v150
  %170 = vmatprep.subr.bf16.mxu0 0
  %171 = vmatpush1.bf16.msra.mxu0 %v151
  %172 = vmatprep.subr.bf16.mxu0 0
  %173 = vmatpush1.bf16.msra.mxu0 %v152
  %174 = vmatprep.subr.bf16.mxu0 0
  %175 = vmatpush1.bf16.msra.mxu0 %v153
  %176 = vmatprep.subr.bf16.mxu0 0
  %177 = vmatpush1.bf16.msra.mxu0 %v154
  %178 = vmatprep.subr.bf16.mxu0 0
  %179 = vmatpush1.bf16.msra.mxu0 %v155
  %180 = vmatprep.subr.bf16.mxu0 0
  %181 = vmatpush1.bf16.msra.mxu0 0
  %182 = vmatprep.subr.bf16.mxu0 0
  %183 = vmatpush1.bf16.msra.mxu0 0
  %184 = vmatprep.subr.bf16.mxu0 0
  %185 = vmatpush1.bf16.msra.mxu0 0
  %186 = vmatprep.subr.bf16.mxu0 0
  %187 = vmatpush1.bf16.msra.mxu0 0
  %188 = vmatprep.subr.bf16.mxu0 0
  %189 = vmatpush1.bf16.msra.mxu0 0
  %190 = vmatprep.subr.bf16.mxu0 0
  %191 = vmatpush1.bf16.msra.mxu0 0
  %192 = vmatprep.subr.bf16.mxu0 0
  %193 = vmatpush1.bf16.msra.mxu0 0
  %194 = vmatprep.subr.bf16.mxu0 0
  %195 = vmatpush1.bf16.msra.mxu0 0
  %196 = vmatprep.mubr.bf16.mxu0 0
  %197 = vmatmul.mubr.bf16.gmra.mrb[0].mxu0 %v100
  %v198 = vpop.f32.mrb[0].mxu0
  %v199 = vadd.f32 0.0, %v198
  %v200 = vpop.f32.mrb[0].mxu0
  %v201 = vpop.f32.mrb[0].mxu0
  %v202 = vadd.f32 0.0, %v201
  %v203 = vpop.f32.mrb[0].mxu0
  %204 = vmatprep.mubr.bf16.mxu0 0
  %205 = vmatmul.mubr.bf16.gmra.mrb[0].mxu0 %v101
  %v206 = vpop.f32.mrb[0].mxu0
  %v207 = vadd.f32 0.0, %v206
  %v208 = vpop.f32.mrb[0].mxu0
  %v209 = vpop.f32.mrb[0].mxu0
  %v210 = vadd.f32 0.0, %v209
  %v211 = vpop.f32.mrb[0].mxu0
  %212 = vmatprep.mubr.bf16.mxu0 0
  %213 = vmatmul.mubr.bf16.gmra.mrb[0].mxu0 %v102
  %v214 = vpop.f32.mrb[0].mxu0
  %v215 = vadd.f32 0.0, %v214
  %v216 = vpop.f32.mrb[0].mxu0
  %v217 = vpop.f32.mrb[0].mxu0
  %v218 = vadd.f32 0.0, %v217
  %v219 = vpop.f32.mrb[0].mxu0
  %220 = vmatprep.mubr.bf16.mxu0 0
  %221 = vmatmul.mubr.bf16.gmra.mrb[0].mxu0 %v103
  %v222 = vpop.f32.mrb[0].mxu0
  %v223 = vadd.f32 0.0, %v222
  %v224 = vpop.f32.mrb[0].mxu0
  %v225 = vpop.f32.mrb[0].mxu0
  %v226 = vadd.f32 0.0, %v225
  %v227 = vpop.f32.mrb[0].mxu0
  %228 = vmatprep.mubr.bf16.mxu0 0
  %229 = vmatmul.mubr.bf16.gmra.mrb[0].mxu0 %v104
  %v230 = vpop.f32.mrb[0].mxu0
  %v231 = vadd.f32 0.0, %v230
  %v232 = vpop.f32.mrb[0].mxu0
  %v233 = vpop.f32.mrb[0].mxu0
  %v234 = vadd.f32 0.0, %v233
  %v235 = vpop.f32.mrb[0].mxu0
  %236 = vmatprep.mubr.bf16.mxu0 0
  %237 = vmatmul.mubr.bf16.gmra.mrb[0].mxu0 %v105
  %v238 = vpop.f32.mrb[0].mxu0
  %v239 = vadd.f32 0.0, %v238
  %v240 = vpop.f32.mrb[0].mxu0
  %v241 = vpop.f32.mrb[0].mxu0
  %v242 = vadd.f32 0.0, %v241
  %v243 = vpop.f32.mrb[0].mxu0
  %244 = vmatprep.mubr.bf16.mxu0 0
  %245 = vmatmul.mubr.bf16.gmra.mrb[0].mxu0 %v106
  %v246 = vpop.f32.mrb[0].mxu0
  %v247 = vadd.f32 0.0, %v246
  %v248 = vpop.f32.mrb[0].mxu0
  %v249 = vpop.f32.mrb[0].mxu0
  %v250 = vadd.f32 0.0, %v249
  %v251 = vpop.f32.mrb[0].mxu0
  %252 = vmatprep.mubr.bf16.mxu0 0
  %253 = vmatmul.mubr.bf16.gmra.mrb[0].mxu0 %v107
  %v254 = vpop.f32.mrb[0].mxu0
  %v255 = vadd.f32 0.0, %v254
  %v256 = vpop.f32.mrb[0].mxu0
  %v257 = vpop.f32.mrb[0].mxu0
  %v258 = vadd.f32 0.0, %v257
  %v259 = vpop.f32.mrb[0].mxu0
  %260 = vdwg.mxu0
  %v261 = vpack.c.bf16 %v202, %v199
  %v262 = vpack.c.bf16 %v210, %v207
  %v263 = vpack.c.bf16 %v218, %v215
  %v264 = vpack.c.bf16 %v226, %v223
  %v265 = vpack.c.bf16 %v234, %v231
  %v266 = vpack.c.bf16 %v242, %v239
  %v267 = vpack.c.bf16 %v250, %v247
  %v268 = vpack.c.bf16 %v258, %v255
  %v269 = vld [vmem:[%s3] sm:$0x1]
  %v270 = vlaneseq
  %v271 = vshrl.u32 %v270, 7
  %v272 = vsub.s32 0, %v271
  %v273 = vrot.slane %v269, %v272
  %v290 = vunpack.c.l.b16 %v20
  %v291 = vunpack.c.l.b16 %v21
  %v292 = vunpack.c.l.b16 %v22
  %v293 = vunpack.c.l.b16 %v23
  %v294 = vunpack.c.l.b16 %v24
  %v295 = vunpack.c.l.b16 %v25
  %v296 = vunpack.c.l.b16 %v26
  %v297 = vunpack.c.l.b16 %v27
  %v298 = vunpack.c.l.b16 %v28
  %v299 = vunpack.c.l.b16 %v29
  %v300 = vunpack.c.l.b16 %v30
  %v301 = vunpack.c.l.b16 %v31
  %v302 = vunpack.c.l.b16 %v32
  %v303 = vunpack.c.l.b16 %v33
  %v304 = vunpack.c.l.b16 %v34
  %v305 = vunpack.c.l.b16 %v35
  %v306 = vpack.c.b16 %v291, %v290
  %v307 = vpack.c.b16 %v293, %v292
  %v308 = vpack.c.b16 %v295, %v294
  %v309 = vpack.c.b16 %v297, %v296
  %v310 = vpack.c.b16 %v299, %v298
  %v311 = vpack.c.b16 %v301, %v300
  %v312 = vpack.c.b16 %v303, %v302
  %v313 = vpack.c.b16 %v305, %v304
  %322 = vmatprep.subr.bf16.mxu0 0
  %323 = vmatpush1.bf16.msra.mxu0 %v261
  %324 = vmatprep.subr.bf16.mxu0 0
  %325 = vmatpush1.bf16.msra.mxu0 %v262
  %326 = vmatprep.subr.bf16.mxu0 0
  %327 = vmatpush1.bf16.msra.mxu0 %v263
  %328 = vmatprep.subr.bf16.mxu0 0
  %329 = vmatpush1.bf16.msra.mxu0 %v264
  %330 = vmatprep.subr.bf16.mxu0 0
  %331 = vmatpush1.bf16.msra.mxu0 %v265
  %332 = vmatprep.subr.bf16.mxu0 0
  %333 = vmatpush1.bf16.msra.mxu0 %v266
  %334 = vmatprep.subr.bf16.mxu0 0
  %335 = vmatpush1.bf16.msra.mxu0 %v267
  %336 = vmatprep.subr.bf16.mxu0 0
  %337 = vmatpush1.bf16.msra.mxu0 %v268
  %338 = vmatprep.subr.bf16.mxu0 0
  %339 = vmatpush1.bf16.msra.mxu0 0
  %340 = vmatprep.subr.bf16.mxu0 0
  %341 = vmatpush1.bf16.msra.mxu0 0
  %342 = vmatprep.subr.bf16.mxu0 0
  %343 = vmatpush1.bf16.msra.mxu0 0
  %344 = vmatprep.subr.bf16.mxu0 0
  %345 = vmatpush1.bf16.msra.mxu0 0
  %346 = vmatprep.subr.bf16.mxu0 0
  %347 = vmatpush1.bf16.msra.mxu0 0
  %348 = vmatprep.subr.bf16.mxu0 0
  %349 = vmatpush1.bf16.msra.mxu0 0
  %350 = vmatprep.subr.bf16.mxu0 0
  %351 = vmatpush1.bf16.msra.mxu0 0
  %352 = vmatprep.subr.bf16.mxu0 0
  %353 = vmatpush1.bf16.msra.mxu0 0
  %354 = vmatprep.mubr.bf16.mxu0 0
  %355 = vmatmul.mubr.bf16.gmra.mrb[0].mxu0 %v306
  %v356 = vpop.f32.mrb[0].mxu0
  %v357 = vadd.f32 %v273, %v356
  %v358 = vpop.f32.mrb[0].mxu0
  %v359 = vpop.f32.mrb[0].mxu0
  %v360 = vadd.f32 %v273, %v359
  %v361 = vpop.f32.mrb[0].mxu0
  %362 = vmatprep.mubr.bf16.mxu0 0
  %363 = vmatmul.mubr.bf16.gmra.mrb[0].mxu0 %v307
  %v364 = vpop.f32.mrb[0].mxu0
  %v365 = vadd.f32 %v273, %v364
  %v366 = vpop.f32.mrb[0].mxu0
  %v367 = vpop.f32.mrb[0].mxu0
  %v368 = vadd.f32 %v273, %v367
  %v369 = vpop.f32.mrb[0].mxu0
  %370 = vmatprep.mubr.bf16.mxu0 0
  %371 = vmatmul.mubr.bf16.gmra.mrb[0].mxu0 %v308
  %v372 = vpop.f32.mrb[0].mxu0
  %v373 = vadd.f32 %v273, %v372
  %v374 = vpop.f32.mrb[0].mxu0
  %v375 = vpop.f32.mrb[0].mxu0
  %v376 = vadd.f32 %v273, %v375
  %v377 = vpop.f32.mrb[0].mxu0
  %378 = vmatprep.mubr.bf16.mxu0 0
  %379 = vmatmul.mubr.bf16.gmra.mrb[0].mxu0 %v309
  %v380 = vpop.f32.mrb[0].mxu0
  %v381 = vadd.f32 %v273, %v380
  %v382 = vpop.f32.mrb[0].mxu0
  %v383 = vpop.f32.mrb[0].mxu0
  %v384 = vadd.f32 %v273, %v383
  %v385 = vpop.f32.mrb[0].mxu0
  %386 = vmatprep.mubr.bf16.mxu0 0
  %387 = vmatmul.mubr.bf16.gmra.mrb[0].mxu0 %v310
  %v388 = vpop.f32.mrb[0].mxu0
  %v389 = vadd.f32 %v273, %v388
  %v390 = vpop.f32.mrb[0].mxu0
  %v391 = vpop.f32.mrb[0].mxu0
  %v392 = vadd.f32 %v273, %v391
  %v393 = vpop.f32.mrb[0].mxu0
  %394 = vmatprep.mubr.bf16.mxu0 0
  %395 = vmatmul.mubr.bf16.gmra.mrb[0].mxu0 %v311
  %v396 = vpop.f32.mrb[0].mxu0
  %v397 = vadd.f32 %v273, %v396
  %v398 = vpop.f32.mrb[0].mxu0
  %v399 = vpop.f32.mrb[0].mxu0
  %v400 = vadd.f32 %v273, %v399
  %v401 = vpop.f32.mrb[0].mxu0
  %402 = vmatprep.mubr.bf16.mxu0 0
  %403 = vmatmul.mubr.bf16.gmra.mrb[0].mxu0 %v312
  %v404 = vpop.f32.mrb[0].mxu0
  %v405 = vadd.f32 %v273, %v404
  %v406 = vpop.f32.mrb[0].mxu0
  %v407 = vpop.f32.mrb[0].mxu0
  %v408 = vadd.f32 %v273, %v407
  %v409 = vpop.f32.mrb[0].mxu0
  %410 = vmatprep.mubr.bf16.mxu0 0
  %411 = vmatmul.mubr.bf16.gmra.mrb[0].mxu0 %v313
  %v412 = vpop.f32.mrb[0].mxu0
  %v413 = vadd.f32 %v273, %v412
  %v414 = vpop.f32.mrb[0].mxu0
  %v415 = vpop.f32.mrb[0].mxu0
  %v416 = vadd.f32 %v273, %v415
  %v417 = vpop.f32.mrb[0].mxu0
  %418 = vdwg.mxu0
  %v419 = vtanh.pop %v357
  %v420 = vtanh.pop %v360
  %v421 = vtanh.pop %v365
  %v422 = vtanh.pop %v368
  %v423 = vtanh.pop %v373
  %v424 = vtanh.pop %v376
  %v425 = vtanh.pop %v381
  %v426 = vtanh.pop %v384
  %v427 = vtanh.pop %v389
  %v428 = vtanh.pop %v392
  %v429 = vtanh.pop %v397
  %v430 = vtanh.pop %v400
  %v431 = vtanh.pop %v405
  %v432 = vtanh.pop %v408
  %v433 = vtanh.pop %v413
  %v434 = vtanh.pop %v416
  %v435 = vpack.c.bf16 %v420, %v419
  %v436 = vpack.c.bf16 %v422, %v421
  %v437 = vpack.c.bf16 %v424, %v423
  %v438 = vpack.c.bf16 %v426, %v425
  %v439 = vpack.c.bf16 %v428, %v427
  %v440 = vpack.c.bf16 %v430, %v429
  %v441 = vpack.c.bf16 %v432, %v431
  %v442 = vpack.c.bf16 %v434, %v433
  %s443 = scalar_lea.vmem %s2, 64
  %v444 = vld [vmem:[%s443] sm:$0xf]
  %v445 = vld [vmem:[%s443 + $0x4] sm:$0xf]
  %v446 = vld [vmem:[%s443 + $0x8] sm:$0xf]
  %v447 = vld [vmem:[%s443 + $0xc] sm:$0xf]
  %v448 = vld [vmem:[%s443 + $0x10] sm:$0xf]
  %v449 = vld [vmem:[%s443 + $0x14] sm:$0xf]
  %v450 = vld [vmem:[%s443 + $0x18] sm:$0xf]
  %v451 = vld [vmem:[%s443 + $0x1c] sm:$0xf]
  %v452 = vld [vmem:[%s443 + $0x20] sm:$0xf]
  %v453 = vld [vmem:[%s443 + $0x24] sm:$0xf]
  %v454 = vld [vmem:[%s443 + $0x28] sm:$0xf]
  %v455 = vld [vmem:[%s443 + $0x2c] sm:$0xf]
  %v456 = vld [vmem:[%s443 + $0x30] sm:$0xf]
  %v457 = vld [vmem:[%s443 + $0x34] sm:$0xf]
  %v458 = vld [vmem:[%s443 + $0x38] sm:$0xf]
  %v459 = vld [vmem:[%s443 + $0x3c] sm:$0xf]
  %v476 = vunpack.c.l.b16 %v444
  %v477 = vunpack.c.l.b16 %v445
  %v478 = vunpack.c.l.b16 %v446
  %v479 = vunpack.c.l.b16 %v447
  %v480 = vunpack.c.l.b16 %v448
  %v481 = vunpack.c.l.b16 %v449
  %v482 = vunpack.c.l.b16 %v450
  %v483 = vunpack.c.l.b16 %v451
  %v484 = vunpack.c.l.b16 %v452
  %v485 = vunpack.c.l.b16 %v453
  %v486 = vunpack.c.l.b16 %v454
  %v487 = vunpack.c.l.b16 %v455
  %v488 = vunpack.c.l.b16 %v456
  %v489 = vunpack.c.l.b16 %v457
  %v490 = vunpack.c.l.b16 %v458
  %v491 = vunpack.c.l.b16 %v459
  %v492 = vpack.c.b16 %v477, %v476
  %v493 = vpack.c.b16 %v479, %v478
  %v494 = vpack.c.b16 %v481, %v480
  %v495 = vpack.c.b16 %v483, %v482
  %v496 = vpack.c.b16 %v485, %v484
  %v497 = vpack.c.b16 %v487, %v486
  %v498 = vpack.c.b16 %v489, %v488
  %v499 = vpack.c.b16 %v491, %v490
  %508 = vmatprep.subr.bf16.mxu0 0
  %509 = vmatpush1.bf16.msra.mxu0 %v492
  %510 = vmatprep.subr.bf16.mxu0 0
  %511 = vmatpush1.bf16.msra.mxu0 %v493
  %512 = vmatprep.subr.bf16.mxu0 0
  %513 = vmatpush1.bf16.msra.mxu0 %v494
  %514 = vmatprep.subr.bf16.mxu0 0
  %515 = vmatpush1.bf16.msra.mxu0 %v495
  %516 = vmatprep.subr.bf16.mxu0 0
  %517 = vmatpush1.bf16.msra.mxu0 %v496
  %518 = vmatprep.subr.bf16.mxu0 0
  %519 = vmatpush1.bf16.msra.mxu0 %v497
  %520 = vmatprep.subr.bf16.mxu0 0
  %521 = vmatpush1.bf16.msra.mxu0 %v498
  %522 = vmatprep.subr.bf16.mxu0 0
  %523 = vmatpush1.bf16.msra.mxu0 %v499
  %524 = vmatprep.subr.bf16.mxu0 0
  %525 = vmatpush1.bf16.msra.mxu0 0
  %526 = vmatprep.subr.bf16.mxu0 0
  %527 = vmatpush1.bf16.msra.mxu0 0
  %528 = vmatprep.subr.bf16.mxu0 0
  %529 = vmatpush1.bf16.msra.mxu0 0
  %530 = vmatprep.subr.bf16.mxu0 0
  %531 = vmatpush1.bf16.msra.mxu0 0
  %532 = vmatprep.subr.bf16.mxu0 0
  %533 = vmatpush1.bf16.msra.mxu0 0
  %534 = vmatprep.subr.bf16.mxu0 0
  %535 = vmatpush1.bf16.msra.mxu0 0
  %536 = vmatprep.subr.bf16.mxu0 0
  %537 = vmatpush1.bf16.msra.mxu0 0
  %538 = vmatprep.subr.bf16.mxu0 0
  %539 = vmatpush1.bf16.msra.mxu0 0
  %540 = vmatprep.mubr.bf16.mxu0 0
  %541 = vmatmul.mubr.bf16.gmra.mrb[0].mxu0 %v435
  %v542 = vpop.f32.mrb[0].mxu0
  %v543 = vadd.f32 0.0, %v542
  %v544 = vpop.f32.mrb[0].mxu0
  %v545 = vpop.f32.mrb[0].mxu0
  %v546 = vadd.f32 0.0, %v545
  %v547 = vpop.f32.mrb[0].mxu0
  %548 = vmatprep.mubr.bf16.mxu0 0
  %549 = vmatmul.mubr.bf16.gmra.mrb[0].mxu0 %v436
  %v550 = vpop.f32.mrb[0].mxu0
  %v551 = vadd.f32 0.0, %v550
  %v552 = vpop.f32.mrb[0].mxu0
  %v553 = vpop.f32.mrb[0].mxu0
  %v554 = vadd.f32 0.0, %v553
  %v555 = vpop.f32.mrb[0].mxu0
  %556 = vmatprep.mubr.bf16.mxu0 0
  %557 = vmatmul.mubr.bf16.gmra.mrb[0].mxu0 %v437
  %v558 = vpop.f32.mrb[0].mxu0
  %v559 = vadd.f32 0.0, %v558
  %v560 = vpop.f32.mrb[0].mxu0
  %v561 = vpop.f32.mrb[0].mxu0
  %v562 = vadd.f32 0.0, %v561
  %v563 = vpop.f32.mrb[0].mxu0
  %564 = vmatprep.mubr.bf16.mxu0 0
  %565 = vmatmul.mubr.bf16.gmra.mrb[0].mxu0 %v438
  %v566 = vpop.f32.mrb[0].mxu0
  %v567 = vadd.f32 0.0, %v566
  %v568 = vpop.f32.mrb[0].mxu0
  %v569 = vpop.f32.mrb[0].mxu0
  %v570 = vadd.f32 0.0, %v569
  %v571 = vpop.f32.mrb[0].mxu0
  %572 = vmatprep.mubr.bf16.mxu0 0
  %573 = vmatmul.mubr.bf16.gmra.mrb[0].mxu0 %v439
  %v574 = vpop.f32.mrb[0].mxu0
  %v575 = vadd.f32 0.0, %v574
  %v576 = vpop.f32.mrb[0].mxu0
  %v577 = vpop.f32.mrb[0].mxu0
  %v578 = vadd.f32 0.0, %v577
  %v579 = vpop.f32.mrb[0].mxu0
  %580 = vmatprep.mubr.bf16.mxu0 0
  %581 = vmatmul.mubr.bf16.gmra.mrb[0].mxu0 %v440
  %v582 = vpop.f32.mrb[0].mxu0
  %v583 = vadd.f32 0.0, %v582
  %v584 = vpop.f32.mrb[0].mxu0
  %v585 = vpop.f32.mrb[0].mxu0
  %v586 = vadd.f32 0.0, %v585
  %v587 = vpop.f32.mrb[0].mxu0
  %588 = vmatprep.mubr.bf16.mxu0 0
  %589 = vmatmul.mubr.bf16.gmra.mrb[0].mxu0 %v441
  %v590 = vpop.f32.mrb[0].mxu0
  %v591 = vadd.f32 0.0, %v590
  %v592 = vpop.f32.mrb[0].mxu0
  %v593 = vpop.f32.mrb[0].mxu0
  %v594 = vadd.f32 0.0, %v593
  %v595 = vpop.f32.mrb[0].mxu0
  %596 = vmatprep.mubr.bf16.mxu0 0
  %597 = vmatmul.mubr.bf16.gmra.mrb[0].mxu0 %v442
  %v598 = vpop.f32.mrb[0].mxu0
  %v599 = vadd.f32 0.0, %v598
  %v600 = vpop.f32.mrb[0].mxu0
  %v601 = vpop.f32.mrb[0].mxu0
  %v602 = vadd.f32 0.0, %v601
  %v603 = vpop.f32.mrb[0].mxu0
  %604 = vdwg.mxu0
  %v605 = vpack.c.bf16 %v546, %v543
  %v606 = vpack.c.bf16 %v554, %v551
  %v607 = vpack.c.bf16 %v562, %v559
  %v608 = vpack.c.bf16 %v570, %v567
  %v609 = vpack.c.bf16 %v578, %v575
  %v610 = vpack.c.bf16 %v586, %v583
  %v611 = vpack.c.bf16 %v594, %v591
  %v612 = vpack.c.bf16 %v602, %v599
  %v613 = vld [vmem:[%s3 + $0x1] sm:$0x1]
  %v614 = vlaneseq
  %v615 = vshrl.u32 %v614, 7
  %v616 = vsub.s32 0, %v615
  %v617 = vrot.slane %v613, %v616
  %618 = vmatprep.subr.bf16.mxu0 0
  %619 = vmatpush1.bf16.msra.mxu0 %v605
  %620 = vmatprep.subr.bf16.mxu0 0
  %621 = vmatpush1.bf16.msra.mxu0 %v606
  %622 = vmatprep.subr.bf16.mxu0 0
  %623 = vmatpush1.bf16.msra.mxu0 %v607
  %624 = vmatprep.subr.bf16.mxu0 0
  %625 = vmatpush1.bf16.msra.mxu0 %v608
  %626 = vmatprep.subr.bf16.mxu0 0
  %627 = vmatpush1.bf16.msra.mxu0 %v609
  %628 = vmatprep.subr.bf16.mxu0 0
  %629 = vmatpush1.bf16.msra.mxu0 %v610
  %630 = vmatprep.subr.bf16.mxu0 0
  %631 = vmatpush1.bf16.msra.mxu0 %v611
  %632 = vmatprep.subr.bf16.mxu0 0
  %633 = vmatpush1.bf16.msra.mxu0 %v612
  %634 = vmatprep.subr.bf16.mxu0 0
  %635 = vmatpush1.bf16.msra.mxu0 0
  %636 = vmatprep.subr.bf16.mxu0 0
  %637 = vmatpush1.bf16.msra.mxu0 0
  %638 = vmatprep.subr.bf16.mxu0 0
  %639 = vmatpush1.bf16.msra.mxu0 0
  %640 = vmatprep.subr.bf16.mxu0 0
  %641 = vmatpush1.bf16.msra.mxu0 0
  %642 = vmatprep.subr.bf16.mxu0 0
  %643 = vmatpush1.bf16.msra.mxu0 0
  %644 = vmatprep.subr.bf16.mxu0 0
  %645 = vmatpush1.bf16.msra.mxu0 0
  %646 = vmatprep.subr.bf16.mxu0 0
  %647 = vmatpush1.bf16.msra.mxu0 0
  %648 = vmatprep.subr.bf16.mxu0 0
  %649 = vmatpush1.bf16.msra.mxu0 0
  %650 = vmatprep.mubr.bf16.mxu0 0
  %651 = vmatmul.mubr.bf16.gmra.mrb[0].mxu0 %v306
  %v652 = vpop.f32.mrb[0].mxu0
  %v653 = vadd.f32 %v617, %v652
  %v654 = vpop.f32.mrb[0].mxu0
  %v655 = vpop.f32.mrb[0].mxu0
  %v656 = vadd.f32 %v617, %v655
  %v657 = vpop.f32.mrb[0].mxu0
  %658 = vmatprep.mubr.bf16.mxu0 0
  %659 = vmatmul.mubr.bf16.gmra.mrb[0].mxu0 %v307
  %v660 = vpop.f32.mrb[0].mxu0
  %v661 = vadd.f32 %v617, %v660
  %v662 = vpop.f32.mrb[0].mxu0
  %v663 = vpop.f32.mrb[0].mxu0
  %v664 = vadd.f32 %v617, %v663
  %v665 = vpop.f32.mrb[0].mxu0
  %666 = vmatprep.mubr.bf16.mxu0 0
  %667 = vmatmul.mubr.bf16.gmra.mrb[0].mxu0 %v308
  %v668 = vpop.f32.mrb[0].mxu0
  %v669 = vadd.f32 %v617, %v668
  %v670 = vpop.f32.mrb[0].mxu0
  %v671 = vpop.f32.mrb[0].mxu0
  %v672 = vadd.f32 %v617, %v671
  %v673 = vpop.f32.mrb[0].mxu0
  %674 = vmatprep.mubr.bf16.mxu0 0
  %675 = vmatmul.mubr.bf16.gmra.mrb[0].mxu0 %v309
  %v676 = vpop.f32.mrb[0].mxu0
  %v677 = vadd.f32 %v617, %v676
  %v678 = vpop.f32.mrb[0].mxu0
  %v679 = vpop.f32.mrb[0].mxu0
  %v680 = vadd.f32 %v617, %v679
  %v681 = vpop.f32.mrb[0].mxu0
  %682 = vmatprep.mubr.bf16.mxu0 0
  %683 = vmatmul.mubr.bf16.gmra.mrb[0].mxu0 %v310
  %v684 = vpop.f32.mrb[0].mxu0
  %v685 = vadd.f32 %v617, %v684
  %v686 = vpop.f32.mrb[0].mxu0
  %v687 = vpop.f32.mrb[0].mxu0
  %v688 = vadd.f32 %v617, %v687
  %v689 = vpop.f32.mrb[0].mxu0
  %690 = vmatprep.mubr.bf16.mxu0 0
  %691 = vmatmul.mubr.bf16.gmra.mrb[0].mxu0 %v311
  %v692 = vpop.f32.mrb[0].mxu0
  %v693 = vadd.f32 %v617, %v692
  %v694 = vpop.f32.mrb[0].mxu0
  %v695 = vpop.f32.mrb[0].mxu0
  %v696 = vadd.f32 %v617, %v695
  %v697 = vpop.f32.mrb[0].mxu0
  %698 = vmatprep.mubr.bf16.mxu0 0
  %699 = vmatmul.mubr.bf16.gmra.mrb[0].mxu0 %v312
  %v700 = vpop.f32.mrb[0].mxu0
  %v701 = vadd.f32 %v617, %v700
  %v702 = vpop.f32.mrb[0].mxu0
  %v703 = vpop.f32.mrb[0].mxu0
  %v704 = vadd.f32 %v617, %v703
  %v705 = vpop.f32.mrb[0].mxu0
  %706 = vmatprep.mubr.bf16.mxu0 0
  %707 = vmatmul.mubr.bf16.gmra.mrb[0].mxu0 %v313
  %v708 = vpop.f32.mrb[0].mxu0
  %v709 = vadd.f32 %v617, %v708
  %v710 = vpop.f32.mrb[0].mxu0
  %v711 = vpop.f32.mrb[0].mxu0
  %v712 = vadd.f32 %v617, %v711
  %v713 = vpop.f32.mrb[0].mxu0
  %714 = vdwg.mxu0
  %v715 = vtanh.pop %v653
  %v716 = vtanh.pop %v656
  %v717 = vtanh.pop %v661
  %v718 = vtanh.pop %v664
  %v719 = vtanh.pop %v669
  %v720 = vtanh.pop %v672
  %v721 = vtanh.pop %v677
  %v722 = vtanh.pop %v680
  %v723 = vtanh.pop %v685
  %v724 = vtanh.pop %v688
  %v725 = vtanh.pop %v693
  %v726 = vtanh.pop %v696
  %v727 = vtanh.pop %v701
  %v728 = vtanh.pop %v704
  %v729 = vtanh.pop %v709
  %v730 = vtanh.pop %v712
  %v731 = vpack.c.bf16 %v716, %v715
  %v732 = vpack.c.bf16 %v718, %v717
  %v733 = vpack.c.bf16 %v720, %v719
  %v734 = vpack.c.bf16 %v722, %v721
  %v735 = vpack.c.bf16 %v724, %v723
  %v736 = vpack.c.bf16 %v726, %v725
  %v737 = vpack.c.bf16 %v728, %v727
  %v738 = vpack.c.bf16 %v730, %v729
  %s739 = scalar_lea.vmem %s2, 128
  %v740 = vld [vmem:[%s739] sm:$0xf]
  %v741 = vld [vmem:[%s739 + $0x4] sm:$0xf]
  %v742 = vld [vmem:[%s739 + $0x8] sm:$0xf]
  %v743 = vld [vmem:[%s739 + $0xc] sm:$0xf]
  %v744 = vld [vmem:[%s739 + $0x10] sm:$0xf]
  %v745 = vld [vmem:[%s739 + $0x14] sm:$0xf]
  %v746 = vld [vmem:[%s739 + $0x18] sm:$0xf]
  %v747 = vld [vmem:[%s739 + $0x1c] sm:$0xf]
  %v748 = vld [vmem:[%s739 + $0x20] sm:$0xf]
  %v749 = vld [vmem:[%s739 + $0x24] sm:$0xf]
  %v750 = vld [vmem:[%s739 + $0x28] sm:$0xf]
  %v751 = vld [vmem:[%s739 + $0x2c] sm:$0xf]
  %v752 = vld [vmem:[%s739 + $0x30] sm:$0xf]
  %v753 = vld [vmem:[%s739 + $0x34] sm:$0xf]
  %v754 = vld [vmem:[%s739 + $0x38] sm:$0xf]
  %v755 = vld [vmem:[%s739 + $0x3c] sm:$0xf]
  %v772 = vunpack.c.l.b16 %v740
  %v773 = vunpack.c.l.b16 %v741
  %v774 = vunpack.c.l.b16 %v742
  %v775 = vunpack.c.l.b16 %v743
  %v776 = vunpack.c.l.b16 %v744
  %v777 = vunpack.c.l.b16 %v745
  %v778 = vunpack.c.l.b16 %v746
  %v779 = vunpack.c.l.b16 %v747
  %v780 = vunpack.c.l.b16 %v748
  %v781 = vunpack.c.l.b16 %v749
  %v782 = vunpack.c.l.b16 %v750
  %v783 = vunpack.c.l.b16 %v751
  %v784 = vunpack.c.l.b16 %v752
  %v785 = vunpack.c.l.b16 %v753
  %v786 = vunpack.c.l.b16 %v754
  %v787 = vunpack.c.l.b16 %v755
  %v788 = vpack.c.b16 %v773, %v772
  %v789 = vpack.c.b16 %v775, %v774
  %v790 = vpack.c.b16 %v777, %v776
  %v791 = vpack.c.b16 %v779, %v778
  %v792 = vpack.c.b16 %v781, %v780
  %v793 = vpack.c.b16 %v783, %v782
  %v794 = vpack.c.b16 %v785, %v784
  %v795 = vpack.c.b16 %v787, %v786
  %804 = vmatprep.subr.bf16.mxu0 0
  %805 = vmatpush1.bf16.msra.mxu0 %v788
  %806 = vmatprep.subr.bf16.mxu0 0
  %807 = vmatpush1.bf16.msra.mxu0 %v789
  %808 = vmatprep.subr.bf16.mxu0 0
  %809 = vmatpush1.bf16.msra.mxu0 %v790
  %810 = vmatprep.subr.bf16.mxu0 0
  %811 = vmatpush1.bf16.msra.mxu0 %v791
  %812 = vmatprep.subr.bf16.mxu0 0
  %813 = vmatpush1.bf16.msra.mxu0 %v792
  %814 = vmatprep.subr.bf16.mxu0 0
  %815 = vmatpush1.bf16.msra.mxu0 %v793
  %816 = vmatprep.subr.bf16.mxu0 0
  %817 = vmatpush1.bf16.msra.mxu0 %v794
  %818 = vmatprep.subr.bf16.mxu0 0
  %819 = vmatpush1.bf16.msra.mxu0 %v795
  %820 = vmatprep.subr.bf16.mxu0 0
  %821 = vmatpush1.bf16.msra.mxu0 0
  %822 = vmatprep.subr.bf16.mxu0 0
  %823 = vmatpush1.bf16.msra.mxu0 0
  %824 = vmatprep.subr.bf16.mxu0 0
  %825 = vmatpush1.bf16.msra.mxu0 0
  %826 = vmatprep.subr.bf16.mxu0 0
  %827 = vmatpush1.bf16.msra.mxu0 0
  %828 = vmatprep.subr.bf16.mxu0 0
  %829 = vmatpush1.bf16.msra.mxu0 0
  %830 = vmatprep.subr.bf16.mxu0 0
  %831 = vmatpush1.bf16.msra.mxu0 0
  %832 = vmatprep.subr.bf16.mxu0 0
  %833 = vmatpush1.bf16.msra.mxu0 0
  %834 = vmatprep.subr.bf16.mxu0 0
  %835 = vmatpush1.bf16.msra.mxu0 0
  %836 = vmatprep.mubr.bf16.mxu0 0
  %837 = vmatmul.mubr.bf16.gmra.mrb[0].mxu0 %v731
  %v838 = vpop.f32.mrb[0].mxu0
  %v839 = vadd.f32 0.0, %v838
  %v840 = vpop.f32.mrb[0].mxu0
  %v841 = vpop.f32.mrb[0].mxu0
  %v842 = vadd.f32 0.0, %v841
  %v843 = vpop.f32.mrb[0].mxu0
  %844 = vmatprep.mubr.bf16.mxu0 0
  %845 = vmatmul.mubr.bf16.gmra.mrb[0].mxu0 %v732
  %v846 = vpop.f32.mrb[0].mxu0
  %v847 = vadd.f32 0.0, %v846
  %v848 = vpop.f32.mrb[0].mxu0
  %v849 = vpop.f32.mrb[0].mxu0
  %v850 = vadd.f32 0.0, %v849
  %v851 = vpop.f32.mrb[0].mxu0
  %852 = vmatprep.mubr.bf16.mxu0 0
  %853 = vmatmul.mubr.bf16.gmra.mrb[0].mxu0 %v733
  %v854 = vpop.f32.mrb[0].mxu0
  %v855 = vadd.f32 0.0, %v854
  %v856 = vpop.f32.mrb[0].mxu0
  %v857 = vpop.f32.mrb[0].mxu0
  %v858 = vadd.f32 0.0, %v857
  %v859 = vpop.f32.mrb[0].mxu0
  %860 = vmatprep.mubr.bf16.mxu0 0
  %861 = vmatmul.mubr.bf16.gmra.mrb[0].mxu0 %v734
  %v862 = vpop.f32.mrb[0].mxu0
  %v863 = vadd.f32 0.0, %v862
  %v864 = vpop.f32.mrb[0].mxu0
  %v865 = vpop.f32.mrb[0].mxu0
  %v866 = vadd.f32 0.0, %v865
  %v867 = vpop.f32.mrb[0].mxu0
  %868 = vmatprep.mubr.bf16.mxu0 0
  %869 = vmatmul.mubr.bf16.gmra.mrb[0].mxu0 %v735
  %v870 = vpop.f32.mrb[0].mxu0
  %v871 = vadd.f32 0.0, %v870
  %v872 = vpop.f32.mrb[0].mxu0
  %v873 = vpop.f32.mrb[0].mxu0
  %v874 = vadd.f32 0.0, %v873
  %v875 = vpop.f32.mrb[0].mxu0
  %876 = vmatprep.mubr.bf16.mxu0 0
  %877 = vmatmul.mubr.bf16.gmra.mrb[0].mxu0 %v736
  %v878 = vpop.f32.mrb[0].mxu0
  %v879 = vadd.f32 0.0, %v878
  %v880 = vpop.f32.mrb[0].mxu0
  %v881 = vpop.f32.mrb[0].mxu0
  %v882 = vadd.f32 0.0, %v881
  %v883 = vpop.f32.mrb[0].mxu0
  %884 = vmatprep.mubr.bf16.mxu0 0
  %885 = vmatmul.mubr.bf16.gmra.mrb[0].mxu0 %v737
  %v886 = vpop.f32.mrb[0].mxu0
  %v887 = vadd.f32 0.0, %v886
  %v888 = vpop.f32.mrb[0].mxu0
  %v889 = vpop.f32.mrb[0].mxu0
  %v890 = vadd.f32 0.0, %v889
  %v891 = vpop.f32.mrb[0].mxu0
  %892 = vmatprep.mubr.bf16.mxu0 0
  %893 = vmatmul.mubr.bf16.gmra.mrb[0].mxu0 %v738
  %v894 = vpop.f32.mrb[0].mxu0
  %v895 = vadd.f32 0.0, %v894
  %v896 = vpop.f32.mrb[0].mxu0
  %v897 = vpop.f32.mrb[0].mxu0
  %v898 = vadd.f32 0.0, %v897
  %v899 = vpop.f32.mrb[0].mxu0
  %900 = vdwg.mxu0
  %v901 = vpack.c.bf16 %v842, %v839
  %v902 = vpack.c.bf16 %v850, %v847
  %v903 = vpack.c.bf16 %v858, %v855
  %v904 = vpack.c.bf16 %v866, %v863
  %v905 = vpack.c.bf16 %v874, %v871
  %v906 = vpack.c.bf16 %v882, %v879
  %v907 = vpack.c.bf16 %v890, %v887
  %v908 = vpack.c.bf16 %v898, %v895
  %v909 = vld [vmem:[%s3 + $0x2] sm:$0x1]
  %v910 = vlaneseq
  %v911 = vshrl.u32 %v910, 7
  %v912 = vsub.s32 0, %v911
  %v913 = vrot.slane %v909, %v912
  %914 = vmatprep.subr.bf16.mxu0 0
  %915 = vmatpush1.bf16.msra.mxu0 %v901
  %916 = vmatprep.subr.bf16.mxu0 0
  %917 = vmatpush1.bf16.msra.mxu0 %v902
  %918 = vmatprep.subr.bf16.mxu0 0
  %919 = vmatpush1.bf16.msra.mxu0 %v903
  %920 = vmatprep.subr.bf16.mxu0 0
  %921 = vmatpush1.bf16.msra.mxu0 %v904
  %922 = vmatprep.subr.bf16.mxu0 0
  %923 = vmatpush1.bf16.msra.mxu0 %v905
  %924 = vmatprep.subr.bf16.mxu0 0
  %925 = vmatpush1.bf16.msra.mxu0 %v906
  %926 = vmatprep.subr.bf16.mxu0 0
  %927 = vmatpush1.bf16.msra.mxu0 %v907
  %928 = vmatprep.subr.bf16.mxu0 0
  %929 = vmatpush1.bf16.msra.mxu0 %v908
  %930 = vmatprep.subr.bf16.mxu0 0
  %931 = vmatpush1.bf16.msra.mxu0 0
  %932 = vmatprep.subr.bf16.mxu0 0
  %933 = vmatpush1.bf16.msra.mxu0 0
  %934 = vmatprep.subr.bf16.mxu0 0
  %935 = vmatpush1.bf16.msra.mxu0 0
  %936 = vmatprep.subr.bf16.mxu0 0
  %937 = vmatpush1.bf16.msra.mxu0 0
  %938 = vmatprep.subr.bf16.mxu0 0
  %939 = vmatpush1.bf16.msra.mxu0 0
  %940 = vmatprep.subr.bf16.mxu0 0
  %941 = vmatpush1.bf16.msra.mxu0 0
  %942 = vmatprep.subr.bf16.mxu0 0
  %943 = vmatpush1.bf16.msra.mxu0 0
  %944 = vmatprep.subr.bf16.mxu0 0
  %945 = vmatpush1.bf16.msra.mxu0 0
  %946 = vmatprep.mubr.bf16.mxu0 0
  %947 = vmatmul.mubr.bf16.gmra.mrb[0].mxu0 %v306
  %v948 = vpop.f32.mrb[0].mxu0
  %v949 = vadd.f32 %v913, %v948
  %v950 = vpop.f32.mrb[0].mxu0
  %v951 = vpop.f32.mrb[0].mxu0
  %v952 = vadd.f32 %v913, %v951
  %v953 = vpop.f32.mrb[0].mxu0
  %954 = vmatprep.mubr.bf16.mxu0 0
  %955 = vmatmul.mubr.bf16.gmra.mrb[0].mxu0 %v307
  %v956 = vpop.f32.mrb[0].mxu0
  %v957 = vadd.f32 %v913, %v956
  %v958 = vpop.f32.mrb[0].mxu0
  %v959 = vpop.f32.mrb[0].mxu0
  %v960 = vadd.f32 %v913, %v959
  %v961 = vpop.f32.mrb[0].mxu0
  %962 = vmatprep.mubr.bf16.mxu0 0
  %963 = vmatmul.mubr.bf16.gmra.mrb[0].mxu0 %v308
  %v964 = vpop.f32.mrb[0].mxu0
  %v965 = vadd.f32 %v913, %v964
  %v966 = vpop.f32.mrb[0].mxu0
  %v967 = vpop.f32.mrb[0].mxu0
  %v968 = vadd.f32 %v913, %v967
  %v969 = vpop.f32.mrb[0].mxu0
  %970 = vmatprep.mubr.bf16.mxu0 0
  %971 = vmatmul.mubr.bf16.gmra.mrb[0].mxu0 %v309
  %v972 = vpop.f32.mrb[0].mxu0
  %v973 = vadd.f32 %v913, %v972
  %v974 = vpop.f32.mrb[0].mxu0
  %v975 = vpop.f32.mrb[0].mxu0
  %v976 = vadd.f32 %v913, %v975
  %v977 = vpop.f32.mrb[0].mxu0
  %978 = vmatprep.mubr.bf16.mxu0 0
  %979 = vmatmul.mubr.bf16.gmra.mrb[0].mxu0 %v310
  %v980 = vpop.f32.mrb[0].mxu0
  %v981 = vadd.f32 %v913, %v980
  %v982 = vpop.f32.mrb[0].mxu0
  %v983 = vpop.f32.mrb[0].mxu0
  %v984 = vadd.f32 %v913, %v983
  %v985 = vpop.f32.mrb[0].mxu0
  %986 = vmatprep.mubr.bf16.mxu0 0
  %987 = vmatmul.mubr.bf16.gmra.mrb[0].mxu0 %v311
  %v988 = vpop.f32.mrb[0].mxu0
  %v989 = vadd.f32 %v913, %v988
  %v990 = vpop.f32.mrb[0].mxu0
  %v991 = vpop.f32.mrb[0].mxu0
  %v992 = vadd.f32 %v913, %v991
  %v993 = vpop.f32.mrb[0].mxu0
  %994 = vmatprep.mubr.bf16.mxu0 0
  %995 = vmatmul.mubr.bf16.gmra.mrb[0].mxu0 %v312
  %v996 = vpop.f32.mrb[0].mxu0
  %v997 = vadd.f32 %v913, %v996
  %v998 = vpop.f32.mrb[0].mxu0
  %v999 = vpop.f32.mrb[0].mxu0
  %v1000 = vadd.f32 %v913, %v999
  %v1001 = vpop.f32.mrb[0].mxu0
  %1002 = vmatprep.mubr.bf16.mxu0 0
  %1003 = vmatmul.mubr.bf16.gmra.mrb[0].mxu0 %v313
  %v1004 = vpop.f32.mrb[0].mxu0
  %v1005 = vadd.f32 %v913, %v1004
  %v1006 = vpop.f32.mrb[0].mxu0
  %v1007 = vpop.f32.mrb[0].mxu0
  %v1008 = vadd.f32 %v913, %v1007
  %v1009 = vpop.f32.mrb[0].mxu0
  %1010 = vdwg.mxu0
  %v1011 = vtanh.pop %v949
  %v1012 = vtanh.pop %v952
  %v1013 = vtanh.pop %v957
  %v1014 = vtanh.pop %v960
  %v1015 = vtanh.pop %v965
  %v1016 = vtanh.pop %v968
  %v1017 = vtanh.pop %v973
  %v1018 = vtanh.pop %v976
  %v1019 = vtanh.pop %v981
  %v1020 = vtanh.pop %v984
  %v1021 = vtanh.pop %v989
  %v1022 = vtanh.pop %v992
  %v1023 = vtanh.pop %v997
  %v1024 = vtanh.pop %v1000
  %v1025 = vtanh.pop %v1005
  %v1026 = vtanh.pop %v1008
  %v1027 = vpack.c.bf16 %v1012, %v1011
  %v1028 = vpack.c.bf16 %v1014, %v1013
  %v1029 = vpack.c.bf16 %v1016, %v1015
  %v1030 = vpack.c.bf16 %v1018, %v1017
  %v1031 = vpack.c.bf16 %v1020, %v1019
  %v1032 = vpack.c.bf16 %v1022, %v1021
  %v1033 = vpack.c.bf16 %v1024, %v1023
  %v1034 = vpack.c.bf16 %v1026, %v1025
  %1035 = vst [vmem:[%s5] sm:$0xff] %v1011
  %1036 = vst [vmem:[%s5 + $0x8] sm:$0xff] %v1012
  %1037 = vst [vmem:[%s5 + $0x10] sm:$0xff] %v1013
  %1038 = vst [vmem:[%s5 + $0x18] sm:$0xff] %v1014
  %1039 = vst [vmem:[%s5 + $0x20] sm:$0xff] %v1015
  %1040 = vst [vmem:[%s5 + $0x28] sm:$0xff] %v1016
  %1041 = vst [vmem:[%s5 + $0x30] sm:$0xff] %v1017
  %1042 = vst [vmem:[%s5 + $0x38] sm:$0xff] %v1018
  %1043 = vst [vmem:[%s5 + $0x40] sm:$0xff] %v1019
  %1044 = vst [vmem:[%s5 + $0x48] sm:$0xff] %v1020
  %1045 = vst [vmem:[%s5 + $0x50] sm:$0xff] %v1021
  %1046 = vst [vmem:[%s5 + $0x58] sm:$0xff] %v1022
  %1047 = vst [vmem:[%s5 + $0x60] sm:$0xff] %v1023
  %1048 = vst [vmem:[%s5 + $0x68] sm:$0xff] %v1024
  %1049 = vst [vmem:[%s5 + $0x70] sm:$0xff] %v1025
  %1050 = vst [vmem:[%s5 + $0x78] sm:$0xff] %v1026
  %s1051 = scalar_lea.vmem %s2, 192
  %v1052 = vld [vmem:[%s1051] sm:$0xf]
  %v1053 = vld [vmem:[%s1051 + $0x4] sm:$0xf]
  %v1054 = vld [vmem:[%s1051 + $0x8] sm:$0xf]
  %v1055 = vld [vmem:[%s1051 + $0xc] sm:$0xf]
  %v1056 = vld [vmem:[%s1051 + $0x10] sm:$0xf]
  %v1057 = vld [vmem:[%s1051 + $0x14] sm:$0xf]
  %v1058 = vld [vmem:[%s1051 + $0x18] sm:$0xf]
  %v1059 = vld [vmem:[%s1051 + $0x1c] sm:$0xf]
  %v1060 = vld [vmem:[%s1051 + $0x20] sm:$0xf]
  %v1061 = vld [vmem:[%s1051 + $0x24] sm:$0xf]
  %v1062 = vld [vmem:[%s1051 + $0x28] sm:$0xf]
  %v1063 = vld [vmem:[%s1051 + $0x2c] sm:$0xf]
  %v1064 = vld [vmem:[%s1051 + $0x30] sm:$0xf]
  %v1065 = vld [vmem:[%s1051 + $0x34] sm:$0xf]
  %v1066 = vld [vmem:[%s1051 + $0x38] sm:$0xf]
  %v1067 = vld [vmem:[%s1051 + $0x3c] sm:$0xf]
  %v1068 = vld [vmem:[%s3 + $0x3] sm:$0x1]
  %v1069 = vlaneseq
  %v1070 = vshrl.u32 %v1069, 7
  %v1071 = vsub.s32 0, %v1070
  %v1072 = vrot.slane %v1068, %v1071
  %v1089 = vunpack.c.l.b16 %v1052
  %v1090 = vunpack.c.l.b16 %v1053
  %v1091 = vunpack.c.l.b16 %v1054
  %v1092 = vunpack.c.l.b16 %v1055
  %v1093 = vunpack.c.l.b16 %v1056
  %v1094 = vunpack.c.l.b16 %v1057
  %v1095 = vunpack.c.l.b16 %v1058
  %v1096 = vunpack.c.l.b16 %v1059
  %v1097 = vunpack.c.l.b16 %v1060
  %v1098 = vunpack.c.l.b16 %v1061
  %v1099 = vunpack.c.l.b16 %v1062
  %v1100 = vunpack.c.l.b16 %v1063
  %v1101 = vunpack.c.l.b16 %v1064
  %v1102 = vunpack.c.l.b16 %v1065
  %v1103 = vunpack.c.l.b16 %v1066
  %v1104 = vunpack.c.l.b16 %v1067
  %v1105 = vpack.c.b16 %v1090, %v1089
  %v1106 = vpack.c.b16 %v1092, %v1091
  %v1107 = vpack.c.b16 %v1094, %v1093
  %v1108 = vpack.c.b16 %v1096, %v1095
  %v1109 = vpack.c.b16 %v1098, %v1097
  %v1110 = vpack.c.b16 %v1100, %v1099
  %v1111 = vpack.c.b16 %v1102, %v1101
  %v1112 = vpack.c.b16 %v1104, %v1103
  %1121 = vmatprep.subr.bf16.mxu0 0
  %1122 = vmatpush1.bf16.msra.mxu0 %v1105
  %1123 = vmatprep.subr.bf16.mxu0 0
  %1124 = vmatpush1.bf16.msra.mxu0 %v1106
  %1125 = vmatprep.subr.bf16.mxu0 0
  %1126 = vmatpush1.bf16.msra.mxu0 %v1107
  %1127 = vmatprep.subr.bf16.mxu0 0
  %1128 = vmatpush1.bf16.msra.mxu0 %v1108
  %1129 = vmatprep.subr.bf16.mxu0 0
  %1130 = vmatpush1.bf16.msra.mxu0 %v1109
  %1131 = vmatprep.subr.bf16.mxu0 0
  %1132 = vmatpush1.bf16.msra.mxu0 %v1110
  %1133 = vmatprep.subr.bf16.mxu0 0
  %1134 = vmatpush1.bf16.msra.mxu0 %v1111
  %1135 = vmatprep.subr.bf16.mxu0 0
  %1136 = vmatpush1.bf16.msra.mxu0 %v1112
  %1137 = vmatprep.subr.bf16.mxu0 0
  %1138 = vmatpush1.bf16.msra.mxu0 0
  %1139 = vmatprep.subr.bf16.mxu0 0
  %1140 = vmatpush1.bf16.msra.mxu0 0
  %1141 = vmatprep.subr.bf16.mxu0 0
  %1142 = vmatpush1.bf16.msra.mxu0 0
  %1143 = vmatprep.subr.bf16.mxu0 0
  %1144 = vmatpush1.bf16.msra.mxu0 0
  %1145 = vmatprep.subr.bf16.mxu0 0
  %1146 = vmatpush1.bf16.msra.mxu0 0
  %1147 = vmatprep.subr.bf16.mxu0 0
  %1148 = vmatpush1.bf16.msra.mxu0 0
  %1149 = vmatprep.subr.bf16.mxu0 0
  %1150 = vmatpush1.bf16.msra.mxu0 0
  %1151 = vmatprep.subr.bf16.mxu0 0
  %1152 = vmatpush1.bf16.msra.mxu0 0
  %1153 = vmatprep.mubr.bf16.mxu0 0
  %1154 = vmatmul.mubr.bf16.gmra.mrb[0].mxu0 %v1027
  %v1155 = vpop.f32.mrb[0].mxu0
  %v1156 = vadd.f32 %v1072, %v1155
  %v1157 = vpop.f32.mrb[0].mxu0
  %v1158 = vpop.f32.mrb[0].mxu0
  %v1159 = vadd.f32 %v1072, %v1158
  %v1160 = vpop.f32.mrb[0].mxu0
  %1161 = vmatprep.mubr.bf16.mxu0 0
  %1162 = vmatmul.mubr.bf16.gmra.mrb[0].mxu0 %v1028
  %v1163 = vpop.f32.mrb[0].mxu0
  %v1164 = vadd.f32 %v1072, %v1163
  %v1165 = vpop.f32.mrb[0].mxu0
  %v1166 = vpop.f32.mrb[0].mxu0
  %v1167 = vadd.f32 %v1072, %v1166
  %v1168 = vpop.f32.mrb[0].mxu0
  %1169 = vmatprep.mubr.bf16.mxu0 0
  %1170 = vmatmul.mubr.bf16.gmra.mrb[0].mxu0 %v1029
  %v1171 = vpop.f32.mrb[0].mxu0
  %v1172 = vadd.f32 %v1072, %v1171
  %v1173 = vpop.f32.mrb[0].mxu0
  %v1174 = vpop.f32.mrb[0].mxu0
  %v1175 = vadd.f32 %v1072, %v1174
  %v1176 = vpop.f32.mrb[0].mxu0
  %1177 = vmatprep.mubr.bf16.mxu0 0
  %1178 = vmatmul.mubr.bf16.gmra.mrb[0].mxu0 %v1030
  %v1179 = vpop.f32.mrb[0].mxu0
  %v1180 = vadd.f32 %v1072, %v1179
  %v1181 = vpop.f32.mrb[0].mxu0
  %v1182 = vpop.f32.mrb[0].mxu0
  %v1183 = vadd.f32 %v1072, %v1182
  %v1184 = vpop.f32.mrb[0].mxu0
  %1185 = vmatprep.mubr.bf16.mxu0 0
  %1186 = vmatmul.mubr.bf16.gmra.mrb[0].mxu0 %v1031
  %v1187 = vpop.f32.mrb[0].mxu0
  %v1188 = vadd.f32 %v1072, %v1187
  %v1189 = vpop.f32.mrb[0].mxu0
  %v1190 = vpop.f32.mrb[0].mxu0
  %v1191 = vadd.f32 %v1072, %v1190
  %v1192 = vpop.f32.mrb[0].mxu0
  %1193 = vmatprep.mubr.bf16.mxu0 0
  %1194 = vmatmul.mubr.bf16.gmra.mrb[0].mxu0 %v1032
  %v1195 = vpop.f32.mrb[0].mxu0
  %v1196 = vadd.f32 %v1072, %v1195
  %v1197 = vpop.f32.mrb[0].mxu0
  %v1198 = vpop.f32.mrb[0].mxu0
  %v1199 = vadd.f32 %v1072, %v1198
  %v1200 = vpop.f32.mrb[0].mxu0
  %1201 = vmatprep.mubr.bf16.mxu0 0
  %1202 = vmatmul.mubr.bf16.gmra.mrb[0].mxu0 %v1033
  %v1203 = vpop.f32.mrb[0].mxu0
  %v1204 = vadd.f32 %v1072, %v1203
  %v1205 = vpop.f32.mrb[0].mxu0
  %v1206 = vpop.f32.mrb[0].mxu0
  %v1207 = vadd.f32 %v1072, %v1206
  %v1208 = vpop.f32.mrb[0].mxu0
  %1209 = vmatprep.mubr.bf16.mxu0 0
  %1210 = vmatmul.mubr.bf16.gmra.mrb[0].mxu0 %v1034
  %v1211 = vpop.f32.mrb[0].mxu0
  %v1212 = vadd.f32 %v1072, %v1211
  %v1213 = vpop.f32.mrb[0].mxu0
  %v1214 = vpop.f32.mrb[0].mxu0
  %v1215 = vadd.f32 %v1072, %v1214
  %v1216 = vpop.f32.mrb[0].mxu0
  %1217 = vdwg.mxu0
  %1218 = vst [vmem:[%s4] sm:$0xff] %v1156
  %1219 = vst [vmem:[%s4 + $0x8] sm:$0xff] %v1159
  %1220 = vst [vmem:[%s4 + $0x10] sm:$0xff] %v1164
  %1221 = vst [vmem:[%s4 + $0x18] sm:$0xff] %v1167
  %1222 = vst [vmem:[%s4 + $0x20] sm:$0xff] %v1172
  %1223 = vst [vmem:[%s4 + $0x28] sm:$0xff] %v1175
  %1224 = vst [vmem:[%s4 + $0x30] sm:$0xff] %v1180
  %1225 = vst [vmem:[%s4 + $0x38] sm:$0xff] %v1183
  %1226 = vst [vmem:[%s4 + $0x40] sm:$0xff] %v1188
  %1227 = vst [vmem:[%s4 + $0x48] sm:$0xff] %v1191
  %1228 = vst [vmem:[%s4 + $0x50] sm:$0xff] %v1196
  %1229 = vst [vmem:[%s4 + $0x58] sm:$0xff] %v1199
  %1230 = vst [vmem:[%s4 + $0x60] sm:$0xff] %v1204
  %1231 = vst [vmem:[%s4 + $0x68] sm:$0xff] %v1207
  %1232 = vst [vmem:[%s4 + $0x70] sm:$0xff] %v1212
  %1233 = vst [vmem:[%s4 + $0x78] sm:$0xff] %v1215
  // Predicated region
  $region18: #{gcn_forward.1} parent=0 // pred_check
    _
  $region19: #{gcn_forward.1} parent=0 // pred_check_branch
    %1235 = sbr.rel (0) target = $region21
  $region20: #{gcn_forward.1} parent=0 // pred_region
    _
  $region21: #{gcn_forward.1} parent=0 // pred_fallthru
    _
  // Predicated region
  $region22: #{gcn_forward.1} parent=0 // pred_check
    _
  $region23: #{gcn_forward.1} parent=0 // pred_check_branch
    %1237 = sbr.rel (0) target = $region25
  $region24: #{gcn_forward.1} parent=0 // pred_region
    _
  $region25: #{gcn_forward.1} parent=0 // pred_fallthru
    _
  // Predicated region
  $region26: #{gcn_forward.1} parent=0 // pred_check
    _
  $region27: #{gcn_forward.1} parent=0 // pred_check_branch
    %1239 = sbr.rel (0) target = $region29
  $region28: #{gcn_forward.1} parent=0 // pred_region
    _
  $region29: #{gcn_forward.1} parent=0 // pred_fallthru
    _
  // Predicated region
  $region30: #{gcn_forward.1} parent=0 // pred_check
    _
  $region31: #{gcn_forward.1} parent=0 // pred_check_branch
    %1241 = sbr.rel (0) target = $region33
  $region32: #{gcn_forward.1} parent=0 // pred_region
    _
  $region33: #{gcn_forward.1} parent=0 // pred_fallthru
    _

</llo_original>
